<compile_context>
chip_gen: v5e
topology: v5e:2x2
jax: 0.10.0
libtpu: 0.0.40
codegen_flags: <defaults>
</compile_context>

<pallas_src>
import jax
import jax.numpy as jnp
from jax.experimental import pallas as pl
from jax.experimental.pallas import tpu as pltpu


# ---------------------------------------------------------------------------
# Pallas kernel: full-width VMEM copy of one (tile_rows, lanes) block.
# ---------------------------------------------------------------------------
def _copy_kernel(x_ref, o_ref):
    o_ref[...] = x_ref[...]


def _round_up(x: int, m: int) -> int:
    return ((x + m - 1) // m) * m


def _choose_lanes(total: int) -> int:
    # Largest lane-dense width (multiple of 128) that divides the element
    # count; otherwise fall back to 128 and pad only the tiny tail.
    for lanes in (1024, 512, 256, 128):
        if total % lanes == 0:
            return lanes
    return 128


_TARGET_BLOCK_BYTES = 4 * 1024 * 1024   # 4 MiB/block -> 16 MiB of double buffers
_VMEM_LIMIT_BYTES = 48 * 1024 * 1024    # headroom under v7x's 64 MiB physical VMEM


@jax.jit
def pallas_passthrough(x: jax.Array) -> jax.Array:
    """Identity copy of an arbitrary-shaped tensor through a Pallas TPU kernel.

    The tensor is viewed as a lane-dense (rows, lanes) slab (lanes a multiple
    of 128) and copied tile-by-tile with automatic double-buffered pipelining.
    """
    orig_shape = x.shape
    total = int(x.size)
    if total == 0:
        return x

    lanes = _choose_lanes(total)
    flat = x.reshape(-1)

    # Pad only the sub-lane tail (< lanes elements) — never whole row-tiles.
    padded_total = _round_up(total, lanes)
    if padded_total != total:
        flat = jnp.pad(flat, (0, padded_total - total))
    rows = padded_total // lanes
    slab = flat.reshape(rows, lanes)

    # Tile rows: multiple of 8, sized by a per-dtype byte budget, and split
    # into >= 2 grid steps when possible so both v7x TensorCores get work.
    bytes_per_row = lanes * slab.dtype.itemsize
    budget_rows = max(8, ((_TARGET_BLOCK_BYTES // bytes_per_row) // 8) * 8)
    if rows <= 8:
        tile_rows = rows  # block dims equal full array dims -> (8,128) rule holds
    else:
        half_rows = _round_up(pl.cdiv(rows, 2), 8)
        tile_rows = min(budget_rows, half_rows)
    grid = (pl.cdiv(rows, tile_rows),)

    out = pl.pallas_call(
        _copy_kernel,
        out_shape=jax.ShapeDtypeStruct(slab.shape, slab.dtype),
        grid=grid,
        in_specs=[pl.BlockSpec((tile_rows, lanes), lambda i: (i, 0))],
        out_specs=pl.BlockSpec((tile_rows, lanes), lambda i: (i, 0)),
        compiler_params=pltpu.CompilerParams(
            dimension_semantics=("parallel",),
            vmem_limit_bytes=_VMEM_LIMIT_BYTES,
        ),
    )(slab)

    out_flat = out.reshape(-1)
    if padded_total != total:
        out_flat = out_flat[:total]
    return out_flat.reshape(orig_shape)


# ---------------------------------------------------------------------------
# Module: faithful to the reference (no parameters, forward returns None).
# ---------------------------------------------------------------------------
class Resnet18:
    """JAX equivalent of the reference PyTorch Resnet18 module.

    The reference __init__ registers no parameters and its forward body is
    empty, so this class holds no state and forward returns None.
    """

    def __init__(self, num_features, num_targets, output_activation="sigmoid", **kwargs):
        # Reference __init__ only calls super().__init__(); no parameters.
        self.num_features = num_features
        self.num_targets = num_targets
        self.output_activation = output_activation

    def forward(self, x):
        # TODO(synk): reference forward has an empty body (`return`) -> None;
        # there is no ResNet compute path to translate into Pallas kernels.
        return None

    __call__ = forward


if __name__ == "__main__":
    key = jax.random.PRNGKey(0)
    k0, k1 = jax.random.split(key)

    # Primary small NCHW input consistent with an image-model signature.
    x = jax.random.normal(k0, (2, 4, 16, 16), dtype=jnp.float32)
    y = pallas_passthrough(x)
    jax.block_until_ready(y)
    assert y.shape == x.shape and y.dtype == x.dtype
    assert bool(jnp.allclose(y, x)), "pass-through kernel mismatch"

    # Odd-shaped input exercising the sub-lane tail-padding path.
    x_odd = jax.random.normal(k1, (2, 3, 5, 7), dtype=jnp.float32)
    y_odd = pallas_passthrough(x_odd)
    jax.block_until_ready(y_odd)
    assert y_odd.shape == x_odd.shape
    assert bool(jnp.allclose(y_odd, x_odd)), "padded pass-through mismatch"

    # Larger input exercising the multi-step (>= 2 grid tiles) path.
    x_big = jax.random.normal(k0, (8, 64, 64, 64), dtype=jnp.float32)
    y_big = pallas_passthrough(x_big)
    jax.block_until_ready(y_big)
    assert bool(jnp.allclose(y_big, x_big)), "tiled pass-through mismatch"

    # Reproduce the reference module's forward semantics exactly.
    model = Resnet18(num_features=4, num_targets=3, output_activation="sigmoid")
    out = model.forward(x)
    assert out is None  # reference forward returns None

    print("KERNEL_OK")
</pallas_src>

<mosaic_0001>
module attributes {stable_mosaic.version = 11 : i64} {
  func.func @_copy_kernel(%arg0: i32, %arg1: memref<2x1024xf32, #tpu.memory_space<vmem>>, %arg2: memref<2x1024xf32, #tpu.memory_space<vmem>>) attributes {dimension_semantics = [#tpu.dimension_semantics<parallel>], iteration_bounds = array<i64: 1>, scalar_prefetch = 0 : i64, scratch_operands = 0 : i64, tpu.core_type = #tpu.core_type<tc>, window_params = [{transform_indices = @transform_0, window_bounds = array<i64: 2, 1024>}, {transform_indices = @transform_1, window_bounds = array<i64: 2, 1024>}]} {
    %c0 = arith.constant 0 : index
    %c0_0 = arith.constant 0 : index
    %0 = vector.load %arg1[%c0, %c0_0] : memref<2x1024xf32, #tpu.memory_space<vmem>>, vector<2x1024xf32>
    %c0_1 = arith.constant 0 : index
    %c0_2 = arith.constant 0 : index
    %1 = vector.load %arg2[%c0_1, %c0_2] : memref<2x1024xf32, #tpu.memory_space<vmem>>, vector<2x1024xf32>
    tpu.vector_store %arg2[%c0_1, %c0_2], %0 {strides = array<i32>} : memref<2x1024xf32, #tpu.memory_space<vmem>>, vector<2x1024xf32>,
    return
  }
  func.func @transform_0(%arg0: i32) -> (i32, i32) {
    %c0_i32 = arith.constant 0 : i32
    %c0_i32_0 = arith.constant 0 : i32
    return %arg0, %c0_i32 : i32, i32
  }
  func.func @transform_1(%arg0: i32) -> (i32, i32) {
    %c0_i32 = arith.constant 0 : i32
    %c0_i32_0 = arith.constant 0 : i32
    return %arg0, %c0_i32 : i32, i32
  }
}

</mosaic_0001>

<llo_original>
// kernel: pallas_passthrough.1
$region0: #{pallas_passthrough.1}
  #allocation0 [shape = 'u32[]', space=smem, size = 0x4, offset = 0x4, fixed_abs, tag = 'smem constant byte address 0x4 - core index']
  #allocation1 [shape = 'u32[72,128]{1,0:T(1,128)}', space=vmem, size = 0x9000, scoped, tag = 'internal scratch']
  %s0 = inlined_call_operand.vmem [shape: f32[2,1024], index: 0, kind: input, shape index: {}]
  %s1 = inlined_call_operand.vmem [shape: f32[2,1024], index: 1, kind: output, shape index: {}]
  %s2 = sld [smem:[#allocation0]]
  $region14: #{pallas_passthrough.1} parent=0
    _
  %s4 = ssub.s32 1, %s2
  %s5 = scalar_select 0, %s4, %s2
  // Predicated region
  $region2: #{pallas_passthrough.1} parent=0 // pred_check
    _
  $region3: #{pallas_passthrough.1} parent=0 // pred_check_branch
    %7 = sbr.rel (0) target = $region5
  $region4: #{pallas_passthrough.1} parent=0 // pred_region
    _
  $region5: #{pallas_passthrough.1} parent=0 // pred_fallthru
    _
  %v8 = vld [vmem:[%s0] sm:$0xff]
  %v9 = vld [vmem:[%s0 + $0x8] sm:$0xff]
  %10 = vst [vmem:[%s1] sm:$0xff] %v8
  %11 = vst [vmem:[%s1 + $0x8] sm:$0xff] %v9
  // Predicated region
  $region6: #{pallas_passthrough.1} parent=0 // pred_check
    _
  $region7: #{pallas_passthrough.1} parent=0 // pred_check_branch
    %13 = sbr.rel (0) target = $region9
  $region8: #{pallas_passthrough.1} parent=0 // pred_region
    _
  $region9: #{pallas_passthrough.1} parent=0 // pred_fallthru
    _
  // Predicated region
  $region10: #{pallas_passthrough.1} parent=0 // pred_check
    _
  $region11: #{pallas_passthrough.1} parent=0 // pred_check_branch
    %15 = sbr.rel (0) target = $region13
  $region12: #{pallas_passthrough.1} parent=0 // pred_region
    _
  $region13: #{pallas_passthrough.1} parent=0 // pred_fallthru
    _

</llo_original>
